<compile_context>
chip_gen: v7x
topology: tpu7x:2x2x1
jax: 0.10.0
libtpu: 0.0.40
codegen_flags: <defaults>
</compile_context>

<pallas_src>
import jax
import jax.numpy as jnp
from jax import lax
from jax.experimental import pallas as pl
from jax.experimental.pallas import tpu as pltpu
import numpy as np


# Row indices inside the packed (8, H) per-feature parameter tile.
_LN_GAMMA, _LN_BETA, _W_TE_T, _B_TE, _W_FC_U, _W_FC_V = range(6)


def link_pred_kernel(x2_ref, dt2_ref, rows_ref, w_te_ref, b_fc_ref, out_ref):
    tb = out_ref.shape[0]

    x = x2_ref[...]                    # (2*TB, H) f32: src rows then dst rows
    dt = dt2_ref[...]                  # (2*TB, 1) f32

    # Static sublane slices of the packed parameter tile (zero-cost views).
    gamma = rows_ref[_LN_GAMMA:_LN_GAMMA + 1, :]     # (1, H)
    beta = rows_ref[_LN_BETA:_LN_BETA + 1, :]
    w_te_t = rows_ref[_W_TE_T:_W_TE_T + 1, :]
    b_te = rows_ref[_B_TE:_B_TE + 1, :]
    w_fc_u = rows_ref[_W_FC_U:_W_FC_U + 1, :]
    w_fc_v = rows_ref[_W_FC_V:_W_FC_V + 1, :]

    # LayerNorm (PyTorch nn.LayerNorm: biased variance, eps=1e-5, affine), f32.
    mu = jnp.mean(x, axis=-1, keepdims=True)
    xc = x - mu
    var = jnp.mean(xc * xc, axis=-1, keepdims=True)
    xn = xc * lax.rsqrt(var + 1e-5) * gamma + beta

    # Time encoder: relu(cat([xn, dt], -1) @ W^T + b) as a split matmul.
    # One stacked (2*TB, H) bf16 MXU matmul covers both src and dst paths.
    h = jnp.dot(xn.astype(jnp.bfloat16), w_te_ref[...],
                preferred_element_type=jnp.float32)
    h = jnp.maximum(h + dt * w_te_t + b_te, 0.0)

    # LinkLayer fc: Linear(2H, 1) on cat([emb_u, emb_v]) as VPU mul + lane
    # reduce (dropout is identity at eval).
    z = h[:tb] * w_fc_u + h[tb:] * w_fc_v
    logits = jnp.sum(z, axis=-1, keepdims=True) + b_fc_ref[0, 0]   # (TB, 1)

    # sigmoid routed through EUP exp + EUP reciprocal.
    out_ref[...] = pl.reciprocal(1.0 + jnp.exp(-logits), approx=True)


def _round_up(x, m):
    return (x + m - 1) // m * m


def tap_gnn_forward(params, h_nodes, last_time, src, dst, t, *, tile_b=128):
    """Gather (plain JAX) + fused LayerNorm/TimeEncoder/LinkLayer Pallas kernel."""
    B = src.shape[0]
    H = h_nodes.shape[1]

    # Batch tile: multiple of 8 sublanes; 128 rows (=> stacked M=256) for big B.
    TB = min(_round_up(tile_b, 8), _round_up(B, 8))
    B_pad = _round_up(B, TB)
    G = B_pad // TB
    pad = B_pad - B

    # --- glue: gather per-sample rows from the node tables ---
    src_emb = h_nodes[src]                        # [B, H]
    dst_emb = h_nodes[dst]                        # [B, H]
    dt_src = t - last_time[src]                   # [B]
    dt_dst = t - last_time[dst]                   # [B]
    if pad:
        src_emb = jnp.pad(src_emb, ((0, pad), (0, 0)))
        dst_emb = jnp.pad(dst_emb, ((0, pad), (0, 0)))
        dt_src = jnp.pad(dt_src, (0, pad))
        dt_dst = jnp.pad(dt_dst, (0, pad))

    # Stack src/dst per batch tile: tile i holds its src rows then its dst rows.
    x2 = jnp.concatenate([src_emb.reshape(G, TB, H),
                          dst_emb.reshape(G, TB, H)], axis=1)      # (G, 2TB, H)
    dt2 = jnp.concatenate([dt_src.reshape(G, TB, 1),
                           dt_dst.reshape(G, TB, 1)], axis=1)      # (G, 2TB, 1)

    # Pack the six (1, H) row-parameters into one 8-sublane-aligned VMEM tile.
    rows = jnp.concatenate([params["ln_gamma"], params["ln_beta"],
                            params["w_te_t"], params["b_te"],
                            params["w_fc_u"], params["w_fc_v"],
                            jnp.zeros((2, H), jnp.float32)], axis=0)  # (8, H)

    w_te_bf16 = params["w_te"].astype(jnp.bfloat16)  # bf16 MXU RHS, halves DMA bytes

    const2 = lambda i: (0, 0)
    out = pl.pallas_call(
        link_pred_kernel,
        out_shape=jax.ShapeDtypeStruct((B_pad, 1), jnp.float32),
        grid=(G,),
        in_specs=[
            pl.BlockSpec((None, 2 * TB, H), lambda i: (i, 0, 0)),  # stacked embeddings
            pl.BlockSpec((None, 2 * TB, 1), lambda i: (i, 0, 0)),  # stacked time deltas
            pl.BlockSpec((8, H), const2),     # packed row params (gamma/beta/...)
            pl.BlockSpec((H, H), const2),     # w_te (bf16)
            pl.BlockSpec(memory_space=pltpu.MemorySpace.SMEM),  # b_fc scalar
        ],
        out_specs=pl.BlockSpec((TB, 1), lambda i: (i, 0)),
        # Default scoped-VMEM limit is ample here; for very large H on v7x
        # (64 MiB VMEM) set vmem_limit_bytes explicitly and shrink TB.
        compiler_params=pltpu.CompilerParams(
            dimension_semantics=("parallel",)),
    )(x2, dt2, rows, w_te_bf16, params["b_fc"])
    return out[:B, 0]   # logits.squeeze().sigmoid() -> [B]


def reference_forward(params, h_nodes, last_time, src, dst, t):
    """Pure-JAX f32 reference mirroring the PyTorch semantics."""
    def layernorm(x):
        mu = jnp.mean(x, -1, keepdims=True)
        var = jnp.mean((x - mu) ** 2, -1, keepdims=True)
        return (x - mu) / jnp.sqrt(var + 1e-5) * params["ln_gamma"] + params["ln_beta"]

    h = layernorm(h_nodes)
    se, de = h[src], h[dst]
    dtu = (t - last_time[src])[:, None]
    dtv = (t - last_time[dst])[:, None]

    def te(e, dt):
        return jax.nn.relu(e @ params["w_te"] + dt * params["w_te_t"] + params["b_te"])

    u, v = te(se, dtu), te(de, dtv)
    logits = (jnp.sum(u * params["w_fc_u"] + v * params["w_fc_v"], axis=-1)
              + params["b_fc"][0, 0])
    return jax.nn.sigmoid(logits)


def init_params(key, H):
    """Deterministic xavier-uniform style init matching the module's shapes."""
    ks = jax.random.split(key, 3)

    def xavier(k, fan_in, fan_out, shape):
        bound = jnp.sqrt(6.0 / (fan_in + fan_out))
        return jax.random.uniform(k, shape, jnp.float32, -bound, bound)

    # TimeEncoder fc1: Linear(H + 1, H)  (torch weight [H, H+1]) -> split & transpose
    w_te_full = xavier(ks[0], H + 1, H, (H + 1, H))
    # LinkLayer fc: Linear(2H, 1)        (torch weight [1, 2H])  -> split, row layout
    w_fc_full = xavier(ks[1], 2 * H, 1, (2 * H,))
    b_te = jax.random.uniform(ks[2], (1, H), jnp.float32, -0.1, 0.1)

    return {
        "ln_gamma": jnp.ones((1, H), jnp.float32),
        "ln_beta": jnp.zeros((1, H), jnp.float32),
        "w_te": w_te_full[:H, :],            # [H, H]
        "w_te_t": w_te_full[H:, :],          # [1, H]
        "b_te": b_te,                        # [1, H]
        "w_fc_u": w_fc_full[:H][None, :],    # [1, H]  (row for VPU reduce)
        "w_fc_v": w_fc_full[H:][None, :],    # [1, H]
        "b_fc": jnp.zeros((1, 1), jnp.float32),
    }


if __name__ == "__main__":
    N, H, B = 16, 32, 8   # nodes, n_hidden, batch of (src, dst, t) samples
    key = jax.random.PRNGKey(0)
    k1, k2, k3, k4, k5, kp = jax.random.split(key, 6)

    # g.ndata['h_self{L}'] and g.ndata['last_time']
    h_nodes = jax.random.normal(k1, (N, H), jnp.float32)
    last_time = jax.random.uniform(k2, (N,), jnp.float32, 0.0, 10.0)

    # batch_samples = (src, dst, t)
    src = jax.random.randint(k3, (B,), 0, N)
    dst = jax.random.randint(k4, (B,), 0, N)
    t = jax.random.uniform(k5, (B,), jnp.float32, 10.0, 20.0)

    params = init_params(kp, H)

    out = tap_gnn_forward(params, h_nodes, last_time, src, dst, t)
    out = jax.block_until_ready(out)

    ref = reference_forward(params, h_nodes, last_time, src, dst, t)
    # bf16 MXU operands + approx EUP reciprocal => looser tolerance than pure f32.
    np.testing.assert_allclose(np.asarray(out), np.asarray(ref), rtol=3e-2, atol=3e-2)

    print("KERNEL_OK")
</pallas_src>

<mosaic_0001>
module attributes {stable_mosaic.version = 11 : i64} {
  func.func @link_pred_kernel(%arg0: i32, %arg1: memref<1x16x32xf32, #tpu.memory_space<vmem>>, %arg2: memref<1x16x1xf32, #tpu.memory_space<vmem>>, %arg3: memref<8x32xf32, #tpu.memory_space<vmem>>, %arg4: memref<32x32xbf16, #tpu.memory_space<vmem>>, %arg5: memref<1x1xf32, #tpu.memory_space<smem>>, %arg6: memref<8x1xf32, #tpu.memory_space<vmem>>) attributes {dimension_semantics = [#tpu.dimension_semantics<parallel>], iteration_bounds = array<i64: 1>, scalar_prefetch = 0 : i64, scratch_operands = 0 : i64, tpu.core_type = #tpu.core_type<tc>, window_params = [{transform_indices = @transform_0, window_bounds = array<i64: 1, 16, 32>}, {transform_indices = @transform_1, window_bounds = array<i64: 1, 16, 1>}, {pipeline_mode = #tpu.pipeline_mode<synchronous>, transform_indices = @transform_2, window_bounds = array<i64: 8, 32>}, {pipeline_mode = #tpu.pipeline_mode<synchronous>, transform_indices = @transform_3, window_bounds = array<i64: 32, 32>}, {transform_indices = @transform_4, window_bounds = array<i64: 1, 1>}, {transform_indices = @transform_5, window_bounds = array<i64: 8, 1>}]} {
    %c0 = arith.constant 0 : index
    %c0_0 = arith.constant 0 : index
    %c0_1 = arith.constant 0 : index
    %0 = vector.load %arg1[%c0, %c0_0, %c0_1] : memref<1x16x32xf32, #tpu.memory_space<vmem>>, vector<1x16x32xf32>
    %1 = vector.shape_cast %0 : vector<1x16x32xf32> to vector<16x32xf32>
    %c0_2 = arith.constant 0 : index
    %c0_3 = arith.constant 0 : index
    %c0_4 = arith.constant 0 : index
    %2 = vector.load %arg2[%c0_2, %c0_3, %c0_4] : memref<1x16x1xf32, #tpu.memory_space<vmem>>, vector<1x16x1xf32>
    %3 = vector.shape_cast %2 : vector<1x16x1xf32> to vector<16x1xf32>
    %c0_5 = arith.constant 0 : index
    %c0_6 = arith.constant 0 : index
    %4 = vector.load %arg3[%c0_5, %c0_6] : memref<8x32xf32, #tpu.memory_space<vmem>>, vector<1x32xf32>
    %c1 = arith.constant 1 : index
    %c0_7 = arith.constant 0 : index
    %5 = vector.load %arg3[%c1, %c0_7] : memref<8x32xf32, #tpu.memory_space<vmem>>, vector<1x32xf32>
    %c2 = arith.constant 2 : index
    %c0_8 = arith.constant 0 : index
    %6 = vector.load %arg3[%c2, %c0_8] : memref<8x32xf32, #tpu.memory_space<vmem>>, vector<1x32xf32>
    %c3 = arith.constant 3 : index
    %c0_9 = arith.constant 0 : index
    %7 = vector.load %arg3[%c3, %c0_9] : memref<8x32xf32, #tpu.memory_space<vmem>>, vector<1x32xf32>
    %c4 = arith.constant 4 : index
    %c0_10 = arith.constant 0 : index
    %8 = vector.load %arg3[%c4, %c0_10] : memref<8x32xf32, #tpu.memory_space<vmem>>, vector<1x32xf32>
    %c5 = arith.constant 5 : index
    %c0_11 = arith.constant 0 : index
    %9 = vector.load %arg3[%c5, %c0_11] : memref<8x32xf32, #tpu.memory_space<vmem>>, vector<1x32xf32>
    %cst = arith.constant dense<0.000000e+00> : vector<16xf32>
    %10 = vector.multi_reduction <add>, %1, %cst [1] : vector<16x32xf32> to vector<16xf32>
    %11 = vector.shape_cast %10 : vector<16xf32> to vector<16x1xf32>
    %cst_12 = arith.constant 3.200000e+01 : f32
    %12 = vector.broadcast %cst_12 : f32 to vector<16x1xf32>
    %13 = arith.divf %11, %12 : vector<16x1xf32>
    %14 = vector.broadcast %13 : vector<16x1xf32> to vector<16x32xf32>
    %15 = arith.subf %1, %14 : vector<16x32xf32>
    %16 = arith.mulf %15, %15 : vector<16x32xf32>
    %cst_13 = arith.constant dense<0.000000e+00> : vector<16xf32>
    %17 = vector.multi_reduction <add>, %16, %cst_13 [1] : vector<16x32xf32> to vector<16xf32>
    %18 = vector.shape_cast %17 : vector<16xf32> to vector<16x1xf32>
    %cst_14 = arith.constant 3.200000e+01 : f32
    %19 = vector.broadcast %cst_14 : f32 to vector<16x1xf32>
    %20 = arith.divf %18, %19 : vector<16x1xf32>
    %cst_15 = arith.constant 9.99999974E-6 : f32
    %21 = vector.broadcast %cst_15 : f32 to vector<16x1xf32>
    %22 = arith.addf %20, %21 : vector<16x1xf32>
    %23 = math.rsqrt %22 : vector<16x1xf32>
    %24 = vector.broadcast %23 : vector<16x1xf32> to vector<16x32xf32>
    %25 = arith.mulf %15, %24 : vector<16x32xf32>
    %26 = vector.broadcast %4 : vector<1x32xf32> to vector<16x32xf32>
    %27 = arith.mulf %25, %26 : vector<16x32xf32>
    %28 = vector.broadcast %5 : vector<1x32xf32> to vector<16x32xf32>
    %29 = arith.addf %27, %28 : vector<16x32xf32>
    %30 = arith.truncf %29 : vector<16x32xf32> to vector<16x32xbf16>
    %c0_16 = arith.constant 0 : index
    %c0_17 = arith.constant 0 : index
    %31 = vector.load %arg4[%c0_16, %c0_17] : memref<32x32xbf16, #tpu.memory_space<vmem>>, vector<32x32xbf16>
    %cst_18 = arith.constant dense<0.000000e+00> : vector<16x32xf32>
    %32 = tpu.matmul %30, %31, %cst_18 {dimension_numbers = #tpu.dot_dimension_numbers<[1], [0], [0], [1], [0, 0, 1, 1], [], []>} : vector<16x32xbf16>, vector<32x32xbf16>, vector<16x32xf32> -> vector<16x32xf32>
    %33 = vector.broadcast %3 : vector<16x1xf32> to vector<16x32xf32>
    %34 = vector.broadcast %6 : vector<1x32xf32> to vector<16x32xf32>
    %35 = arith.mulf %33, %34 : vector<16x32xf32>
    %36 = arith.addf %32, %35 : vector<16x32xf32>
    %37 = vector.broadcast %7 : vector<1x32xf32> to vector<16x32xf32>
    %38 = arith.addf %36, %37 : vector<16x32xf32>
    %cst_19 = arith.constant 0.000000e+00 : f32
    %39 = vector.broadcast %cst_19 : f32 to vector<16x32xf32>
    %40 = arith.maximumf %38, %39 : vector<16x32xf32>
    %41 = vector.extract_strided_slice %40 {offsets = [0, 0], sizes = [8, 32], strides = [1, 1]} : vector<16x32xf32> to vector<8x32xf32>
    %42 = vector.broadcast %8 : vector<1x32xf32> to vector<8x32xf32>
    %43 = arith.mulf %41, %42 : vector<8x32xf32>
    %44 = vector.extract_strided_slice %40 {offsets = [8, 0], sizes = [8, 32], strides = [1, 1]} : vector<16x32xf32> to vector<8x32xf32>
    %45 = vector.broadcast %9 : vector<1x32xf32> to vector<8x32xf32>
    %46 = arith.mulf %44, %45 : vector<8x32xf32>
    %47 = arith.addf %43, %46 : vector<8x32xf32>
    %cst_20 = arith.constant dense<0.000000e+00> : vector<8xf32>
    %48 = vector.multi_reduction <add>, %47, %cst_20 [1] : vector<8x32xf32> to vector<8xf32>
    %49 = vector.shape_cast %48 : vector<8xf32> to vector<8x1xf32>
    %c0_21 = arith.constant 0 : index
    %c0_22 = arith.constant 0 : index
    %50 = memref.load %arg5[%c0_21, %c0_22] : memref<1x1xf32, #tpu.memory_space<smem>>
    %51 = vector.broadcast %50 : f32 to vector<8x1xf32>
    %52 = arith.addf %49, %51 : vector<8x1xf32>
    %cst_23 = arith.constant 0.000000e+00 : f32
    %53 = vector.broadcast %cst_23 : f32 to vector<8x1xf32>
    %54 = arith.subf %53, %52 : vector<8x1xf32>
    %55 = math.exp %54 : vector<8x1xf32>
    %cst_24 = arith.constant 1.000000e+00 : f32
    %56 = vector.broadcast %cst_24 : f32 to vector<8x1xf32>
    %57 = arith.addf %56, %55 : vector<8x1xf32>
    %58 = tpu.reciprocal %57 {approx = true} : vector<8x1xf32> -> vector<8x1xf32>
    %c0_25 = arith.constant 0 : index
    %c0_26 = arith.constant 0 : index
    %59 = vector.load %arg6[%c0_25, %c0_26] : memref<8x1xf32, #tpu.memory_space<vmem>>, vector<8x1xf32>
    tpu.vector_store %arg6[%c0_25, %c0_26], %58 {strides = array<i32>} : memref<8x1xf32, #tpu.memory_space<vmem>>, vector<8x1xf32>,
    return
  }
  func.func @transform_0(%arg0: i32) -> (i32, i32, i32) {
    %c0_i32 = arith.constant 0 : i32
    %c0_i32_0 = arith.constant 0 : i32
    %c0_i32_1 = arith.constant 0 : i32
    return %arg0, %c0_i32, %c0_i32_0 : i32, i32, i32
  }
  func.func @transform_1(%arg0: i32) -> (i32, i32, i32) {
    %c0_i32 = arith.constant 0 : i32
    %c0_i32_0 = arith.constant 0 : i32
    %c0_i32_1 = arith.constant 0 : i32
    return %arg0, %c0_i32, %c0_i32_0 : i32, i32, i32
  }
  func.func @transform_2(%arg0: i32) -> (i32, i32) {
    %c0_i32 = arith.constant 0 : i32
    %c0_i32_0 = arith.constant 0 : i32
    %c0_i32_1 = arith.constant 0 : i32
    return %c0_i32, %c0_i32_0 : i32, i32
  }
  func.func @transform_3(%arg0: i32) -> (i32, i32) {
    %c0_i32 = arith.constant 0 : i32
    %c0_i32_0 = arith.constant 0 : i32
    %c0_i32_1 = arith.constant 0 : i32
    return %c0_i32, %c0_i32_0 : i32, i32
  }
  func.func @transform_4(%arg0: i32) -> (i32, i32) {
    %c0_i32 = arith.constant 0 : i32
    %c0_i32_0 = arith.constant 0 : i32
    %c0_i32_1 = arith.constant 0 : i32
    return %c0_i32, %c0_i32_0 : i32, i32
  }
  func.func @transform_5(%arg0: i32) -> (i32, i32) {
    %c0_i32 = arith.constant 0 : i32
    %c0_i32_0 = arith.constant 0 : i32
    return %arg0, %c0_i32 : i32, i32
  }
}

</mosaic_0001>

<llo_original>
// kernel: tpu_custom_call.1
$region0: #{tpu_custom_call.1}
  #allocation0 [shape = 'u32[]', space=smem, size = 0x4, offset = 0x4, fixed_abs, tag = 'smem constant byte address 0x4 - core index']
  #allocation1 [shape = 'u32[144,128]{1,0:T(1,128)}', space=vmem, size = 0x12000, scoped, tag = 'internal scratch']
  #allocation2 [shape = 'f32[1,1]{1,0:T(1,128)S(6)}', space=smem, size = 0x200, scoped, tag = 'scoped memory for tpu_custom_call.1']
  %s0 = inlined_call_operand.vmem [shape: f32[1,16,32], index: 0, kind: input, shape index: {}]
  %s1 = inlined_call_operand.vmem [shape: f32[1,16,1], index: 1, kind: input, shape index: {}]
  %s2 = inlined_call_operand.hbm [shape: f32[8,32], index: 2, kind: input, shape index: {}]
  %s3 = inlined_call_operand.vmem [shape: bf16[32,32], index: 3, kind: input, shape index: {}]
  %s4 = inlined_call_operand.<no memory space> [shape: f32[1,1], index: 4, kind: input, shape index: {}]
  %s5 = inlined_call_operand.vmem [shape: f32[8,1], index: 5, kind: output, shape index: {}]
  %s6 = sld [smem:[#allocation0]]
  $region34: #{tpu_custom_call.1} parent=0
    _
  %s8 = ssub.s32 1, %s6
  %s9 = scalar_select 0, %s8, %s6
  %10 = sst [smem:[#allocation2]] %s4
  $region1: #{tpu_custom_call.1} parent=0
    #allocation3 [shape = 'u8[4096]{0}', space=vmem, size = 0x1000, scoped, tag = 'input window, operand 2, single buffered']
    #allocation4 [shape = 's32[1]{0}', space=sflag, size = 0x4, scoped, tag = 'scoped memory for tpu_custom_call.1']
    %11 = vsyncpa [#allocation4], 0
    // Predicated region
    $region2: #{tpu_custom_call.1} parent=1 // pred_check
      _
    $region3: #{tpu_custom_call.1} parent=1 // pred_check_branch
      %13 = sbr.rel (0) target = $region5
    $region4: #{tpu_custom_call.1} parent=1 // pred_region
      _
    $region5: #{tpu_custom_call.1} parent=1 // pred_fallthru
      _
    // Predicated region
    $region6: #{tpu_custom_call.1} parent=1 // pred_check
      _
    $region7: #{tpu_custom_call.1} parent=1 // pred_check_branch
      %15 = sbr.rel (0) target = $region9
    $region8: #{tpu_custom_call.1} parent=1 // pred_region
      _
    $region9: #{tpu_custom_call.1} parent=1 // pred_fallthru
      _
    // Predicated region
    $region10: #{tpu_custom_call.1} parent=1 // pred_check
      _
    $region11: #{tpu_custom_call.1} parent=1 // pred_check_branch
      %17 = sbr.rel (0) target = $region13
    $region12: #{tpu_custom_call.1} parent=1 // pred_region
      %s19 = ssub.s32 128, 128
      %20 = vsyncadd [#allocation4], %s19
      %s22 = sshll.u32 [#allocation3], 4
      %s23 = int_to_ptr.vmem [resolvable:$true] %s22
      %25 = dma.hbm_to_vmem [thread:$0]  %s2, 128, %s23, [#allocation4]
    $region13: #{tpu_custom_call.1} parent=1 // pred_fallthru
      _
    // Predicated region
    $region14: #{tpu_custom_call.1} parent=1 // pred_check
      _
    $region15: #{tpu_custom_call.1} parent=1 // pred_check_branch
      %27 = sbr.rel (0) target = $region17
    $region16: #{tpu_custom_call.1} parent=1 // pred_region
      _
    $region17: #{tpu_custom_call.1} parent=1 // pred_fallthru
      _
    // Predicated region
    $region18: #{tpu_custom_call.1} parent=1 // pred_check
      _
    $region19: #{tpu_custom_call.1} parent=1 // pred_check_branch
      %29 = sbr.rel (0) target = $region21
    $region20: #{tpu_custom_call.1} parent=1 // pred_region
      _
    $region21: #{tpu_custom_call.1} parent=1 // pred_fallthru
      _
    // Predicated region
    $region22: #{tpu_custom_call.1} parent=1 // pred_check
      _
    $region23: #{tpu_custom_call.1} parent=1 // pred_check_branch
      %31 = sbr.rel (0) target = $region25
    $region24: #{tpu_custom_call.1} parent=1 // pred_region
      %32 = dma.done [#allocation4], 128
    $region25: #{tpu_custom_call.1} parent=1 // pred_fallthru
      _
    %v34 = vld [vmem:[%s0] sm:$0xff]
    %v35 = vld [vmem:[%s0 + $0x8] sm:$0xff]
    %v36 = vld [vmem:[%s1] sm:$0xff]
    %v37 = vld [vmem:[%s1 + $0x8] sm:$0xff]
    %v38 = vld [vmem:[#allocation3] sm:$0x1]
    %v39 = vld [vmem:[#allocation3 + $0x1] sm:$0x1]
    %v40 = vld [vmem:[#allocation3 + $0x2] sm:$0x1]
    %v41 = vld [vmem:[#allocation3 + $0x3] sm:$0x1]
    %v42 = vld [vmem:[#allocation3 + $0x4] sm:$0x1]
    %v43 = vld [vmem:[#allocation3 + $0x5] sm:$0x1]
    %vm44 = vcmask 261120
    %v45 = vsel %vm44, %v34, 0.0
    %46 = vadd.xlane.f32.xlu0 %v45
    %v47 = vpop.xlane.xlu0 %46
    %v48 = vsel %vm44, %v35, 0.0
    %49 = vadd.xlane.f32.xlu0 %v48
    %v50 = vpop.xlane.xlu0 %49
    %v51 = vrcp.pop 32.0
    %v52 = vmul.f32 %v47, %v51
    %v53 = vmul.f32 %v50, %v51
    %v54 = vsub.f32 %v34, %v52
    %v55 = vsub.f32 %v35, %v53
    %v56 = vmul.f32 %v54, %v54
    %v57 = vmul.f32 %v55, %v55
    %v58 = vsel %vm44, %v56, 0.0
    %59 = vadd.xlane.f32.xlu0 %v58
    %v60 = vpop.xlane.xlu0 %59
    %v61 = vsel %vm44, %v57, 0.0
    %62 = vadd.xlane.f32.xlu0 %v61
    %v63 = vpop.xlane.xlu0 %62
    %v64 = vmul.f32 %v60, %v51
    %v65 = vmul.f32 %v63, %v51
    %v66 = vadd.f32 %v64, 1e-05
    %v67 = vadd.f32 %v65, 1e-05
    %v68 = vrsqrt.pop %v66
    %v69 = vrsqrt.pop %v67
    %v70 = vmul.f32 %v54, %v68
    %v71 = vmul.f32 %v55, %v69
    %v72 = vlaneseq
    %v73 = vshrl.u32 %v72, 7
    %v74 = vsub.s32 0, %v73
    %v75 = vrot.slane %v38, %v74
    %v76 = vmul.f32 %v70, %v75
    %v77 = vmul.f32 %v71, %v75
    %v78 = vlaneseq
    %v79 = vshrl.u32 %v78, 7
    %v80 = vsub.s32 0, %v79
    %v81 = vrot.slane %v39, %v80
    %v82 = vadd.f32 %v76, %v81
    %v83 = vadd.f32 %v77, %v81
    %v84 = vpack.c.bf16 %v83, %v82
    %v85 = vld [vmem:[%s3] sm:$0xf]
    %v86 = vld [vmem:[%s3 + $0x4] sm:$0xf]
    %v87 = vld [vmem:[%s3 + $0x8] sm:$0xf]
    %v88 = vld [vmem:[%s3 + $0xc] sm:$0xf]
    %90 = vset.pattern.permute.xlu0 0
    %91 = vperm.xlu0 %90, %v36
    %v92 = vpop.permute.xlu0 %91
    %95 = vset.pattern.permute.xlu0 0
    %96 = vperm.xlu0 %95, %v37
    %v97 = vpop.permute.xlu0 %96
    %v99 = vlaneseq
    %v100 = vshrl.u32 %v99, 7
    %v101 = vsub.s32 0, %v100
    %v102 = vrot.slane %v40, %v101
    %v103 = vmul.f32 %v92, %v102
    %v104 = vmul.f32 %v97, %v102
    %v109 = vunpack.c.l.b16 %v85
    %v110 = vunpack.c.l.b16 %v86
    %v111 = vunpack.c.l.b16 %v87
    %v112 = vunpack.c.l.b16 %v88
    %v113 = vpack.c.b16 %v110, %v109
    %v114 = vpack.c.b16 %v112, %v111
    %v118 = vsel %vm44, %v84, 0
    %120 = vmatprep.subr.bf16.mxu0 0
    %121 = vmatpush1.bf16.msra.mxu0 %v113
    %122 = vmatprep.subr.bf16.mxu0 0
    %123 = vmatpush1.bf16.msra.mxu0 %v114
    %124 = vmatprep.subr.bf16.mxu0 0
    %125 = vmatpush1.bf16.msra.mxu0 0
    %126 = vmatprep.subr.bf16.mxu0 0
    %127 = vmatpush1.bf16.msra.mxu0 0
    %128 = vmatprep.subr.bf16.mxu0 0
    %129 = vmatpush1.bf16.msra.mxu0 0
    %130 = vmatprep.subr.bf16.mxu0 0
    %131 = vmatpush1.bf16.msra.mxu0 0
    %132 = vmatprep.subr.bf16.mxu0 0
    %133 = vmatpush1.bf16.msra.mxu0 0
    %134 = vmatprep.subr.bf16.mxu0 0
    %135 = vmatpush1.bf16.msra.mxu0 0
    %136 = vmatprep.subr.bf16.mxu0 0
    %137 = vmatpush1.bf16.msra.mxu0 0
    %138 = vmatprep.subr.bf16.mxu0 0
    %139 = vmatpush1.bf16.msra.mxu0 0
    %140 = vmatprep.subr.bf16.mxu0 0
    %141 = vmatpush1.bf16.msra.mxu0 0
    %142 = vmatprep.subr.bf16.mxu0 0
    %143 = vmatpush1.bf16.msra.mxu0 0
    %144 = vmatprep.subr.bf16.mxu0 0
    %145 = vmatpush1.bf16.msra.mxu0 0
    %146 = vmatprep.subr.bf16.mxu0 0
    %147 = vmatpush1.bf16.msra.mxu0 0
    %148 = vmatprep.subr.bf16.mxu0 0
    %149 = vmatpush1.bf16.msra.mxu0 0
    %150 = vmatprep.subr.bf16.mxu0 0
    %151 = vmatpush1.bf16.msra.mxu0 0
    %152 = vmatprep.mubr.bf16.mxu0 0
    %153 = vmatmul.mubr.bf16.gmra.mrb[0].mxu0 %v118
    %v154 = vpop.f32.mrb[0].mxu0
    %v155 = vadd.f32 %v103, %v154
    %v156 = vpop.f32.mrb[0].mxu0
    %v157 = vpop.f32.mrb[0].mxu0
    %v158 = vadd.f32 %v104, %v157
    %v159 = vpop.f32.mrb[0].mxu0
    %160 = vdwg.mxu0
    %v161 = vlaneseq
    %v162 = vshrl.u32 %v161, 7
    %v163 = vsub.s32 0, %v162
    %v164 = vrot.slane %v41, %v163
    %v165 = vadd.f32 %v155, %v164
    %v166 = vadd.f32 %v158, %v164
    %v167 = vmax.f32 %v165, 0.0
    %v168 = vmax.f32 %v166, 0.0
    %v169 = vlaneseq
    %v170 = vshrl.u32 %v169, 7
    %v171 = vsub.s32 0, %v170
    %v172 = vrot.slane %v42, %v171
    %v173 = vmul.f32 %v167, %v172
    %v174 = vlaneseq
    %v175 = vshrl.u32 %v174, 7
    %v176 = vsub.s32 0, %v175
    %v177 = vrot.slane %v43, %v176
    %v178 = vmul.f32 %v168, %v177
    %v179 = vadd.f32 %v173, %v178
    %v180 = vsel %vm44, %v179, 0.0
    %181 = vadd.xlane.f32.xlu0 %v180
    %v182 = vpop.xlane.xlu0 %181
    %s183 = sld [smem:[#allocation2]]
    %v184 = vstv %s183
    %v185 = vadd.f32 %v182, %v184
    %v186 = vsub.f32 0.0, %v185
    %v187 = vmul.f32 %v186, 1.442695
    %v188 = vpow.pop %v187
    %v189 = vadd.f32 %v188, 1.0
    %v190 = vrcp.pop %v189
    %vm191 = vcmask 7168
    %192 = vst.msk [vmem:[%s5] sm:$0xff] %vm191, %v190
    // Predicated region
    $region26: #{tpu_custom_call.1} parent=1 // pred_check
      _
    $region27: #{tpu_custom_call.1} parent=1 // pred_check_branch
      %194 = sbr.rel (0) target = $region29
    $region28: #{tpu_custom_call.1} parent=1 // pred_region
      _
    $region29: #{tpu_custom_call.1} parent=1 // pred_fallthru
      _
    // Predicated region
    $region30: #{tpu_custom_call.1} parent=1 // pred_check
      _
    $region31: #{tpu_custom_call.1} parent=1 // pred_check_branch
      %196 = sbr.rel (0) target = $region33
    $region32: #{tpu_custom_call.1} parent=1 // pred_region
      _
    $region33: #{tpu_custom_call.1} parent=1 // pred_fallthru
      _
    %197 = vsyncpa [#allocation4], 1

</llo_original>
